<compile_context>
chip_gen: v5e
topology: v5e:2x2
jax: 0.10.0
libtpu: 0.0.40
codegen_flags: <defaults>
</compile_context>

<pallas_src>
import numpy as np
import jax
import jax.numpy as jnp
from jax import lax
from jax.experimental import pallas as pl
from jax.experimental.pallas import tpu as pltpu

# ----- loss hyper-parameters (deterministic, in-script; no checkpoints) -----
VAR_WEIGHT = 1.0
DIST_WEIGHT = 1.0
MARGIN_VAR = 0.1
MARGIN_DIST = 1.0
IGNORE_LABEL = 5
# In the reference, C = max(gt[gt < ignore_label]); classes with zero pixels
# contribute nothing, so iterating the static 1..IGNORE_LABEL-1 range and
# skipping empty classes is semantically identical.
NUM_CLASSES = IGNORE_LABEL - 1

_LANES = 128
_SUBS = 32   # pad sublanes to a multiple of 32 so the int8 gt tiling is clean


def _make_push_pull_kernel(bt, Sp, ch):
    """Kernel over a block of `bt` lane-dense planes of shape (Sp, 128),
    walked in chunks of `ch` sublanes."""
    n_chunks = Sp // ch
    n_sub = ch // 8

    def kernel(feat_ref, gt_ref, out_ref):
        # feat_ref: (bt, Sp, 128) f32   gt_ref: (bt, Sp, 128) i8
        # out_ref : (bt, 8, 128) f32 ; row k of each plane's tile holds
        #           [pull_sum, pull_n, push_sum, push_n, 0, 0, 0, 0][k]
        zero = jnp.float32(0.0)
        one = jnp.float32(1.0)
        two = jnp.float32(2.0)
        row_idx = lax.broadcasted_iota(jnp.int32, (8, _LANES), 0)

        def load_chunk(bb, t):
            # One chunk of the plane, loaded ONCE and widened to f32 so that
            # class masks share feat's layout (no relayout in the selects).
            start = t * ch
            if not isinstance(start, int):
                start = pl.multiple_of(start, ch)
            ft = feat_ref[bb, pl.ds(start, ch), :]
            gtf = gt_ref[bb, pl.ds(start, ch), :].astype(jnp.float32)
            return (ft.reshape(n_sub, 8, _LANES),
                    gtf.reshape(n_sub, 8, _LANES))

        def run_chunks(body, init):
            # Short fixed trip counts: static unroll (LLO visibility).
            if n_chunks <= 8:
                carry = init
                for t in range(n_chunks):
                    carry = body(t, carry)
                return carry
            return lax.fori_loop(0, n_chunks, body, init)

        for bb in range(bt):  # static unroll over planes in this block
            # ---- phase 1: single fused walk -> per-class count & sum ----
            def p1_body(t, carry):
                ft, gtf = load_chunk(bb, t)
                out = []
                for c in range(NUM_CLASSES):
                    mb = gtf == jnp.float32(c + 1)
                    cnt_c = carry[2 * c] + jnp.sum(mb.astype(jnp.float32), axis=0)
                    sm_c = carry[2 * c + 1] + jnp.sum(
                        jnp.where(mb, ft, zero), axis=0)
                    out.append(cnt_c)
                    out.append(sm_c)
                return tuple(out)

            init = tuple(jnp.zeros((8, _LANES), jnp.float32)
                         for _ in range(2 * NUM_CLASSES))
            acc = run_chunks(p1_body, init)

            mus, invs, presents = [], [], []
            for c in range(NUM_CLASSES):
                cnt = jnp.sum(acc[2 * c])
                s = jnp.sum(acc[2 * c + 1])
                safe = jnp.maximum(cnt, one)
                mus.append(s / safe)          # O(NUM_CLASSES) scalar divides
                invs.append(one / safe)
                presents.append(cnt > zero)

            # ---- phase 2: fused pull pass (second walk, masks recomputed) ----
            def p2_body(t, pull_acc):
                ft, gtf = load_chunk(bb, t)
                mean_map = jnp.zeros_like(ft)
                w_map = jnp.zeros_like(ft)
                for c in range(NUM_CLASSES):
                    mb = gtf == jnp.float32(c + 1)
                    mean_map = jnp.where(mb, mus[c], mean_map)
                    w_map = jnp.where(mb, invs[c], w_map)
                d = jnp.maximum(jnp.abs(ft - mean_map) - MARGIN_VAR, zero)
                return pull_acc + jnp.sum(d * d * w_map, axis=0)

            pull_tile = run_chunks(p2_body, jnp.zeros((8, _LANES), jnp.float32))
            pull_sum = jnp.sum(pull_tile)
            pull_n = zero
            for c in range(NUM_CLASSES):
                pull_n = pull_n + jnp.where(presents[c], one, zero)

            # ---- push: unordered pairs, doubled (== ordered i!=j reference) ----
            push_sum = zero
            push_n = zero
            for i in range(NUM_CLASSES):
                for j in range(i + 1, NUM_CLASSES):
                    both = jnp.logical_and(presents[i], presents[j])
                    t_ = jnp.maximum(
                        two * MARGIN_DIST - jnp.abs(mus[i] - mus[j]), zero)
                    push_sum = push_sum + jnp.where(both, two * t_ * t_, zero)
                    push_n = push_n + jnp.where(both, two, zero)

            # ---- pack the 4 partials into a lane-dense (8,128) tile ----
            tile = jnp.where(row_idx == 0, pull_sum,
                   jnp.where(row_idx == 1, pull_n,
                   jnp.where(row_idx == 2, push_sum,
                   jnp.where(row_idx == 3, push_n, zero))))
            out_ref[bb] = tile

    return kernel


def _vmem_capacity_bytes():
    try:
        info = pltpu.get_tpu_info()
        for attr in ("vmem_capacity_bytes", "vmem_bytes", "vmem_size_bytes"):
            v = getattr(info, attr, None)
            if v:
                return int(v)
    except Exception:
        pass
    return 64 << 20   # conservative fallback = v7x physical VMEM


def _pick_chunk(Sp):
    """Sublane-chunk size for the in-kernel plane walk (multiple of 32)."""
    if Sp <= 256:
        return Sp
    for c in (256, 128, 64, 32):
        if Sp % c == 0:
            return c
    return 32


def _plan(B, P):
    """Choose padded plane size, chunk, planes-per-step (bt) and VMEM limit."""
    pad_to = _SUBS * _LANES
    P_pad = ((P + pad_to - 1) // pad_to) * pad_to
    Sp = P_pad // _LANES
    ch = _pick_chunk(Sp)

    phys = _vmem_capacity_bytes()
    budget = (phys * 3) // 4          # 48 MiB on v7x, ~96 MiB on v5e/v6e
    limit_cap = phys - (8 << 20)      # leave compiler scratch headroom

    plane_in_bytes = Sp * _LANES * (4 + 1)      # f32 feat + i8 gt
    out_blk_bytes = 8 * _LANES * 4
    temp_bytes = 16 * ch * _LANES * 4           # chunk-sized live temps (est.)

    def need(bt_):
        return 2 * bt_ * (plane_in_bytes + out_blk_bytes) + temp_bytes

    if need(1) > budget:
        # TODO(synk): for multi-megapixel planes add a spatial ("arbitrary")
        # grid axis with a two-phase count/sum-then-pull structure instead of
        # whole-plane blocks.
        raise ValueError(
            f"plane too large for single-block VMEM plan: need {need(1)} B > "
            f"budget {budget} B")

    # bt only pays off for small maps (amortizes ~0.35us/step overhead); keep
    # the grid at >=4 (else >=2) steps so megacore sharding / pipelining work.
    cands = (8, 4, 2, 1) if Sp <= 128 else (2, 1)
    bt = 1
    picked = False
    for min_steps in (4, 2, 1):
        for cand in cands:
            if B % cand == 0 and B // cand >= min_steps and need(cand) <= budget:
                bt = cand
                picked = True
                break
        if picked:
            break

    vmem_limit = int(min(max(need(bt) + (8 << 20), 32 << 20), limit_cap))
    return P_pad, Sp, ch, bt, vmem_limit


@jax.jit
def push_pull_loss(featmap, gt):
    """featmap: [B,1,H,W] float, gt: [B,1,H,W] int. Returns scalar loss."""
    B, C, H, W = featmap.shape
    assert C == 1 and featmap.shape == gt.shape
    P = H * W
    P_pad, Sp, ch, bt, vmem_limit = _plan(B, P)

    # TODO(synk): on v5e consider shipping feat as bf16 (HBM-bandwidth bound)
    # and widening to f32 in-kernel, after verifying tolerance.
    feat = featmap.reshape(B, P).astype(jnp.float32)
    # Clamp labels into [0, IGNORE_LABEL] before the int8 cast so out-of-range
    # labels can never wrap onto a real class id (semantics unchanged: every
    # clamped value is background or ignored).
    gti = jnp.clip(gt.reshape(B, P).astype(jnp.int32), 0, IGNORE_LABEL)
    if P_pad != P:
        # pad gt with 0 (background) and feat with 0 so padded pixels never
        # join any class mask.
        feat = jnp.pad(feat, ((0, 0), (0, P_pad - P)))
        gti = jnp.pad(gti, ((0, 0), (0, P_pad - P)))
    feat = feat.reshape(B, Sp, _LANES)
    gti = gti.reshape(B, Sp, _LANES).astype(jnp.int8)   # 1 B/px HBM traffic

    partials = pl.pallas_call(
        _make_push_pull_kernel(bt, Sp, ch),
        out_shape=jax.ShapeDtypeStruct((B, 8, _LANES), jnp.float32),
        grid_spec=pltpu.PrefetchScalarGridSpec(
            num_scalar_prefetch=0,
            grid=(B // bt,),
            in_specs=[
                pl.BlockSpec((bt, Sp, _LANES), lambda g: (g, 0, 0)),
                pl.BlockSpec((bt, Sp, _LANES), lambda g: (g, 0, 0)),
            ],
            out_specs=pl.BlockSpec((bt, 8, _LANES), lambda g: (g, 0, 0)),
        ),
        compiler_params=pltpu.CompilerParams(
            dimension_semantics=("parallel",),
            vmem_limit_bytes=vmem_limit),
    )(feat, gti)

    # Tiny JAX epilogue: combine per-plane partials into the scalar loss.
    totals = jnp.sum(partials[:, :4, 0], axis=0)  # [pull_sum, pull_n, push_sum, push_n]
    pull_sum, pull_n = totals[0], totals[1]
    push_sum, push_n = totals[2], totals[3]
    zero = jnp.float32(0.0)
    one = jnp.float32(1.0)
    pull_loss = jnp.where(pull_n > zero,
                          pull_sum / jnp.maximum(pull_n, one) * VAR_WEIGHT, zero)
    push_loss = jnp.where(push_n > zero,
                          push_sum / jnp.maximum(push_n, one) * DIST_WEIGHT, zero)
    return pull_loss + push_loss


def reference_loss(featmap, gt):
    """Pure-numpy transcription of the PyTorch forward pass."""
    featmap = np.asarray(featmap, dtype=np.float32)
    gt = np.asarray(gt)
    valid = gt[gt < IGNORE_LABEL]
    C = int(valid.max()) if valid.size else 0
    pull, push = [], []
    for b in range(featmap.shape[0]):
        bf = featmap[b, 0]
        bg = gt[b, 0]
        means = {}
        for i in range(1, C + 1):
            m = bg == i
            if m.sum() == 0:
                continue
            mu = bf[m].mean()
            means[i] = mu
            pull.append(
                (np.clip(np.abs(bf[m] - mu) - MARGIN_VAR, 0.0, None) ** 2).mean())
        for i in range(1, C + 1):
            for j in range(1, C + 1):
                if i == j or i not in means or j not in means:
                    continue
                push.append(
                    np.clip(2 * MARGIN_DIST - abs(means[i] - means[j]), 0.0, None) ** 2)
    pull_loss = float(np.mean(pull)) * VAR_WEIGHT if pull else 0.0
    push_loss = float(np.mean(push)) * DIST_WEIGHT if push else 0.0
    return pull_loss + push_loss


if __name__ == "__main__":
    key = jax.random.PRNGKey(0)
    k_feat, k_gt = jax.random.split(key)
    B, H, W = 2, 16, 16
    featmap = jax.random.normal(k_feat, (B, 1, H, W), dtype=jnp.float32)
    # labels in [0, IGNORE_LABEL]: 0 = background, 1..4 = instances, 5 = ignore
    gt = jax.random.randint(k_gt, (B, 1, H, W), 0, IGNORE_LABEL + 1,
                            dtype=jnp.int32)

    loss = push_pull_loss(featmap, gt)
    loss = jax.block_until_ready(loss)

    ref = reference_loss(np.asarray(featmap), np.asarray(gt))
    np.testing.assert_allclose(float(loss), ref, rtol=1e-3, atol=1e-4)
    print("KERNEL_OK")
</pallas_src>

<mosaic_0001>
module attributes {stable_mosaic.version = 11 : i64} {
  func.func @kernel(%arg0: i32, %arg1: memref<1x32x128xf32, #tpu.memory_space<vmem>>, %arg2: memref<1x32x128xi8, #tpu.memory_space<vmem>>, %arg3: memref<1x8x128xf32, #tpu.memory_space<vmem>>) attributes {dimension_semantics = [#tpu.dimension_semantics<parallel>], iteration_bounds = array<i64: 2>, scalar_prefetch = 0 : i64, scratch_operands = 0 : i64, tpu.core_type = #tpu.core_type<tc>, window_params = [{transform_indices = @transform_0, window_bounds = array<i64: 1, 32, 128>}, {transform_indices = @transform_1, window_bounds = array<i64: 1, 32, 128>}, {transform_indices = @transform_2, window_bounds = array<i64: 1, 8, 128>}]} {
    %0 = tpu.iota {dimensions = array<i32: 0>} : vector<8x128xi32>
    %cst = arith.constant 0.000000e+00 : f32
    %1 = vector.broadcast %cst : f32 to vector<8x128xf32>
    %cst_0 = arith.constant 0.000000e+00 : f32
    %2 = vector.broadcast %cst_0 : f32 to vector<8x128xf32>
    %cst_1 = arith.constant 0.000000e+00 : f32
    %3 = vector.broadcast %cst_1 : f32 to vector<8x128xf32>
    %cst_2 = arith.constant 0.000000e+00 : f32
    %4 = vector.broadcast %cst_2 : f32 to vector<8x128xf32>
    %cst_3 = arith.constant 0.000000e+00 : f32
    %5 = vector.broadcast %cst_3 : f32 to vector<8x128xf32>
    %cst_4 = arith.constant 0.000000e+00 : f32
    %6 = vector.broadcast %cst_4 : f32 to vector<8x128xf32>
    %cst_5 = arith.constant 0.000000e+00 : f32
    %7 = vector.broadcast %cst_5 : f32 to vector<8x128xf32>
    %cst_6 = arith.constant 0.000000e+00 : f32
    %8 = vector.broadcast %cst_6 : f32 to vector<8x128xf32>
    %c0 = arith.constant 0 : index
    %c0_7 = arith.constant 0 : index
    %c0_8 = arith.constant 0 : index
    %9 = vector.load %arg1[%c0, %c0_7, %c0_8] : memref<1x32x128xf32, #tpu.memory_space<vmem>>, vector<1x32x128xf32>
    %10 = vector.shape_cast %9 : vector<1x32x128xf32> to vector<32x128xf32>
    %c0_9 = arith.constant 0 : index
    %c0_10 = arith.constant 0 : index
    %c0_11 = arith.constant 0 : index
    %11 = vector.load %arg2[%c0_9, %c0_10, %c0_11] : memref<1x32x128xi8, #tpu.memory_space<vmem>>, vector<1x32x128xi8>
    %12 = vector.shape_cast %11 : vector<1x32x128xi8> to vector<32x128xi8>
    %13 = arith.sitofp %12 : vector<32x128xi8> to vector<32x128xf32>
    %14 = vector.shape_cast %10 : vector<32x128xf32> to vector<4x8x128xf32>
    %15 = vector.shape_cast %13 : vector<32x128xf32> to vector<4x8x128xf32>
    %cst_12 = arith.constant 1.000000e+00 : f32
    %16 = vector.broadcast %cst_12 : f32 to vector<4x8x128xf32>
    %17 = arith.cmpf oeq, %15, %16 : vector<4x8x128xf32>
    %18 = arith.extui %17 : vector<4x8x128xi1> to vector<4x8x128xi32>
    %19 = arith.sitofp %18 : vector<4x8x128xi32> to vector<4x8x128xf32>
    %cst_13 = arith.constant dense<0.000000e+00> : vector<8x128xf32>
    %20 = vector.multi_reduction <add>, %19, %cst_13 [0] : vector<4x8x128xf32> to vector<8x128xf32>
    %21 = arith.addf %1, %20 : vector<8x128xf32>
    %cst_14 = arith.constant 0.000000e+00 : f32
    %22 = vector.broadcast %cst_14 : f32 to vector<4x8x128xf32>
    %23 = arith.select %17, %14, %22 : vector<4x8x128xi1>, vector<4x8x128xf32>
    %cst_15 = arith.constant dense<0.000000e+00> : vector<8x128xf32>
    %24 = vector.multi_reduction <add>, %23, %cst_15 [0] : vector<4x8x128xf32> to vector<8x128xf32>
    %25 = arith.addf %2, %24 : vector<8x128xf32>
    %cst_16 = arith.constant 2.000000e+00 : f32
    %26 = vector.broadcast %cst_16 : f32 to vector<4x8x128xf32>
    %27 = arith.cmpf oeq, %15, %26 : vector<4x8x128xf32>
    %28 = arith.extui %27 : vector<4x8x128xi1> to vector<4x8x128xi32>
    %29 = arith.sitofp %28 : vector<4x8x128xi32> to vector<4x8x128xf32>
    %cst_17 = arith.constant dense<0.000000e+00> : vector<8x128xf32>
    %30 = vector.multi_reduction <add>, %29, %cst_17 [0] : vector<4x8x128xf32> to vector<8x128xf32>
    %31 = arith.addf %3, %30 : vector<8x128xf32>
    %cst_18 = arith.constant 0.000000e+00 : f32
    %32 = vector.broadcast %cst_18 : f32 to vector<4x8x128xf32>
    %33 = arith.select %27, %14, %32 : vector<4x8x128xi1>, vector<4x8x128xf32>
    %cst_19 = arith.constant dense<0.000000e+00> : vector<8x128xf32>
    %34 = vector.multi_reduction <add>, %33, %cst_19 [0] : vector<4x8x128xf32> to vector<8x128xf32>
    %35 = arith.addf %4, %34 : vector<8x128xf32>
    %cst_20 = arith.constant 3.000000e+00 : f32
    %36 = vector.broadcast %cst_20 : f32 to vector<4x8x128xf32>
    %37 = arith.cmpf oeq, %15, %36 : vector<4x8x128xf32>
    %38 = arith.extui %37 : vector<4x8x128xi1> to vector<4x8x128xi32>
    %39 = arith.sitofp %38 : vector<4x8x128xi32> to vector<4x8x128xf32>
    %cst_21 = arith.constant dense<0.000000e+00> : vector<8x128xf32>
    %40 = vector.multi_reduction <add>, %39, %cst_21 [0] : vector<4x8x128xf32> to vector<8x128xf32>
    %41 = arith.addf %5, %40 : vector<8x128xf32>
    %cst_22 = arith.constant 0.000000e+00 : f32
    %42 = vector.broadcast %cst_22 : f32 to vector<4x8x128xf32>
    %43 = arith.select %37, %14, %42 : vector<4x8x128xi1>, vector<4x8x128xf32>
    %cst_23 = arith.constant dense<0.000000e+00> : vector<8x128xf32>
    %44 = vector.multi_reduction <add>, %43, %cst_23 [0] : vector<4x8x128xf32> to vector<8x128xf32>
    %45 = arith.addf %6, %44 : vector<8x128xf32>
    %cst_24 = arith.constant 4.000000e+00 : f32
    %46 = vector.broadcast %cst_24 : f32 to vector<4x8x128xf32>
    %47 = arith.cmpf oeq, %15, %46 : vector<4x8x128xf32>
    %48 = arith.extui %47 : vector<4x8x128xi1> to vector<4x8x128xi32>
    %49 = arith.sitofp %48 : vector<4x8x128xi32> to vector<4x8x128xf32>
    %cst_25 = arith.constant dense<0.000000e+00> : vector<8x128xf32>
    %50 = vector.multi_reduction <add>, %49, %cst_25 [0] : vector<4x8x128xf32> to vector<8x128xf32>
    %51 = arith.addf %7, %50 : vector<8x128xf32>
    %cst_26 = arith.constant 0.000000e+00 : f32
    %52 = vector.broadcast %cst_26 : f32 to vector<4x8x128xf32>
    %53 = arith.select %47, %14, %52 : vector<4x8x128xi1>, vector<4x8x128xf32>
    %cst_27 = arith.constant dense<0.000000e+00> : vector<8x128xf32>
    %54 = vector.multi_reduction <add>, %53, %cst_27 [0] : vector<4x8x128xf32> to vector<8x128xf32>
    %55 = arith.addf %8, %54 : vector<8x128xf32>
    %56 = vector.shape_cast %21 : vector<8x128xf32> to vector<1x8x128xf32>
    %cst_28 = arith.constant dense<0.000000e+00> : vector<1xf32>
    %57 = vector.multi_reduction <add>, %56, %cst_28 [1, 2] : vector<1x8x128xf32> to vector<1xf32>
    %58 = vector.shape_cast %57 : vector<1xf32> to vector<1x1x1xf32>
    %59 = vector.extract %58[0, 0, 0] : f32 from vector<1x1x1xf32>
    %60 = vector.shape_cast %25 : vector<8x128xf32> to vector<1x8x128xf32>
    %cst_29 = arith.constant dense<0.000000e+00> : vector<1xf32>
    %61 = vector.multi_reduction <add>, %60, %cst_29 [1, 2] : vector<1x8x128xf32> to vector<1xf32>
    %62 = vector.shape_cast %61 : vector<1xf32> to vector<1x1x1xf32>
    %63 = vector.extract %62[0, 0, 0] : f32 from vector<1x1x1xf32>
    %cst_30 = arith.constant 1.000000e+00 : f32
    %64 = arith.maximumf %59, %cst_30 : f32
    %65 = arith.divf %63, %64 : f32
    %cst_31 = arith.constant 1.000000e+00 : f32
    %66 = arith.divf %cst_31, %64 : f32
    %cst_32 = arith.constant 0.000000e+00 : f32
    %67 = arith.cmpf ogt, %59, %cst_32 : f32
    %68 = vector.shape_cast %31 : vector<8x128xf32> to vector<1x8x128xf32>
    %cst_33 = arith.constant dense<0.000000e+00> : vector<1xf32>
    %69 = vector.multi_reduction <add>, %68, %cst_33 [1, 2] : vector<1x8x128xf32> to vector<1xf32>
    %70 = vector.shape_cast %69 : vector<1xf32> to vector<1x1x1xf32>
    %71 = vector.extract %70[0, 0, 0] : f32 from vector<1x1x1xf32>
    %72 = vector.shape_cast %35 : vector<8x128xf32> to vector<1x8x128xf32>
    %cst_34 = arith.constant dense<0.000000e+00> : vector<1xf32>
    %73 = vector.multi_reduction <add>, %72, %cst_34 [1, 2] : vector<1x8x128xf32> to vector<1xf32>
    %74 = vector.shape_cast %73 : vector<1xf32> to vector<1x1x1xf32>
    %75 = vector.extract %74[0, 0, 0] : f32 from vector<1x1x1xf32>
    %cst_35 = arith.constant 1.000000e+00 : f32
    %76 = arith.maximumf %71, %cst_35 : f32
    %77 = arith.divf %75, %76 : f32
    %cst_36 = arith.constant 1.000000e+00 : f32
    %78 = arith.divf %cst_36, %76 : f32
    %cst_37 = arith.constant 0.000000e+00 : f32
    %79 = arith.cmpf ogt, %71, %cst_37 : f32
    %80 = vector.shape_cast %41 : vector<8x128xf32> to vector<1x8x128xf32>
    %cst_38 = arith.constant dense<0.000000e+00> : vector<1xf32>
    %81 = vector.multi_reduction <add>, %80, %cst_38 [1, 2] : vector<1x8x128xf32> to vector<1xf32>
    %82 = vector.shape_cast %81 : vector<1xf32> to vector<1x1x1xf32>
    %83 = vector.extract %82[0, 0, 0] : f32 from vector<1x1x1xf32>
    %84 = vector.shape_cast %45 : vector<8x128xf32> to vector<1x8x128xf32>
    %cst_39 = arith.constant dense<0.000000e+00> : vector<1xf32>
    %85 = vector.multi_reduction <add>, %84, %cst_39 [1, 2] : vector<1x8x128xf32> to vector<1xf32>
    %86 = vector.shape_cast %85 : vector<1xf32> to vector<1x1x1xf32>
    %87 = vector.extract %86[0, 0, 0] : f32 from vector<1x1x1xf32>
    %cst_40 = arith.constant 1.000000e+00 : f32
    %88 = arith.maximumf %83, %cst_40 : f32
    %89 = arith.divf %87, %88 : f32
    %cst_41 = arith.constant 1.000000e+00 : f32
    %90 = arith.divf %cst_41, %88 : f32
    %cst_42 = arith.constant 0.000000e+00 : f32
    %91 = arith.cmpf ogt, %83, %cst_42 : f32
    %92 = vector.shape_cast %51 : vector<8x128xf32> to vector<1x8x128xf32>
    %cst_43 = arith.constant dense<0.000000e+00> : vector<1xf32>
    %93 = vector.multi_reduction <add>, %92, %cst_43 [1, 2] : vector<1x8x128xf32> to vector<1xf32>
    %94 = vector.shape_cast %93 : vector<1xf32> to vector<1x1x1xf32>
    %95 = vector.extract %94[0, 0, 0] : f32 from vector<1x1x1xf32>
    %96 = vector.shape_cast %55 : vector<8x128xf32> to vector<1x8x128xf32>
    %cst_44 = arith.constant dense<0.000000e+00> : vector<1xf32>
    %97 = vector.multi_reduction <add>, %96, %cst_44 [1, 2] : vector<1x8x128xf32> to vector<1xf32>
    %98 = vector.shape_cast %97 : vector<1xf32> to vector<1x1x1xf32>
    %99 = vector.extract %98[0, 0, 0] : f32 from vector<1x1x1xf32>
    %cst_45 = arith.constant 1.000000e+00 : f32
    %100 = arith.maximumf %95, %cst_45 : f32
    %101 = arith.divf %99, %100 : f32
    %cst_46 = arith.constant 1.000000e+00 : f32
    %102 = arith.divf %cst_46, %100 : f32
    %cst_47 = arith.constant 0.000000e+00 : f32
    %103 = arith.cmpf ogt, %95, %cst_47 : f32
    %cst_48 = arith.constant 0.000000e+00 : f32
    %104 = vector.broadcast %cst_48 : f32 to vector<8x128xf32>
    %c0_49 = arith.constant 0 : index
    %c0_50 = arith.constant 0 : index
    %c0_51 = arith.constant 0 : index
    %105 = vector.load %arg1[%c0_49, %c0_50, %c0_51] : memref<1x32x128xf32, #tpu.memory_space<vmem>>, vector<1x32x128xf32>
    %106 = vector.shape_cast %105 : vector<1x32x128xf32> to vector<32x128xf32>
    %c0_52 = arith.constant 0 : index
    %c0_53 = arith.constant 0 : index
    %c0_54 = arith.constant 0 : index
    %107 = vector.load %arg2[%c0_52, %c0_53, %c0_54] : memref<1x32x128xi8, #tpu.memory_space<vmem>>, vector<1x32x128xi8>
    %108 = vector.shape_cast %107 : vector<1x32x128xi8> to vector<32x128xi8>
    %109 = arith.sitofp %108 : vector<32x128xi8> to vector<32x128xf32>
    %110 = vector.shape_cast %106 : vector<32x128xf32> to vector<4x8x128xf32>
    %111 = vector.shape_cast %109 : vector<32x128xf32> to vector<4x8x128xf32>
    %cst_55 = arith.constant 0.000000e+00 : f32
    %112 = vector.broadcast %cst_55 : f32 to vector<4x8x128xf32>
    %cst_56 = arith.constant 0.000000e+00 : f32
    %113 = vector.broadcast %cst_56 : f32 to vector<4x8x128xf32>
    %cst_57 = arith.constant 1.000000e+00 : f32
    %114 = vector.broadcast %cst_57 : f32 to vector<4x8x128xf32>
    %115 = arith.cmpf oeq, %111, %114 : vector<4x8x128xf32>
    %116 = vector.broadcast %65 : f32 to vector<4x8x128xf32>
    %117 = arith.select %115, %116, %112 : vector<4x8x128xi1>, vector<4x8x128xf32>
    %118 = vector.broadcast %66 : f32 to vector<4x8x128xf32>
    %119 = arith.select %115, %118, %113 : vector<4x8x128xi1>, vector<4x8x128xf32>
    %cst_58 = arith.constant 2.000000e+00 : f32
    %120 = vector.broadcast %cst_58 : f32 to vector<4x8x128xf32>
    %121 = arith.cmpf oeq, %111, %120 : vector<4x8x128xf32>
    %122 = vector.broadcast %77 : f32 to vector<4x8x128xf32>
    %123 = arith.select %121, %122, %117 : vector<4x8x128xi1>, vector<4x8x128xf32>
    %124 = vector.broadcast %78 : f32 to vector<4x8x128xf32>
    %125 = arith.select %121, %124, %119 : vector<4x8x128xi1>, vector<4x8x128xf32>
    %cst_59 = arith.constant 3.000000e+00 : f32
    %126 = vector.broadcast %cst_59 : f32 to vector<4x8x128xf32>
    %127 = arith.cmpf oeq, %111, %126 : vector<4x8x128xf32>
    %128 = vector.broadcast %89 : f32 to vector<4x8x128xf32>
    %129 = arith.select %127, %128, %123 : vector<4x8x128xi1>, vector<4x8x128xf32>
    %130 = vector.broadcast %90 : f32 to vector<4x8x128xf32>
    %131 = arith.select %127, %130, %125 : vector<4x8x128xi1>, vector<4x8x128xf32>
    %cst_60 = arith.constant 4.000000e+00 : f32
    %132 = vector.broadcast %cst_60 : f32 to vector<4x8x128xf32>
    %133 = arith.cmpf oeq, %111, %132 : vector<4x8x128xf32>
    %134 = vector.broadcast %101 : f32 to vector<4x8x128xf32>
    %135 = arith.select %133, %134, %129 : vector<4x8x128xi1>, vector<4x8x128xf32>
    %136 = vector.broadcast %102 : f32 to vector<4x8x128xf32>
    %137 = arith.select %133, %136, %131 : vector<4x8x128xi1>, vector<4x8x128xf32>
    %138 = arith.subf %110, %135 : vector<4x8x128xf32>
    %139 = math.absf %138 : vector<4x8x128xf32>
    %cst_61 = arith.constant 1.000000e-01 : f32
    %140 = vector.broadcast %cst_61 : f32 to vector<4x8x128xf32>
    %141 = arith.subf %139, %140 : vector<4x8x128xf32>
    %cst_62 = arith.constant 0.000000e+00 : f32
    %142 = vector.broadcast %cst_62 : f32 to vector<4x8x128xf32>
    %143 = arith.maximumf %141, %142 : vector<4x8x128xf32>
    %144 = arith.mulf %143, %143 : vector<4x8x128xf32>
    %145 = arith.mulf %144, %137 : vector<4x8x128xf32>
    %cst_63 = arith.constant dense<0.000000e+00> : vector<8x128xf32>
    %146 = vector.multi_reduction <add>, %145, %cst_63 [0] : vector<4x8x128xf32> to vector<8x128xf32>
    %147 = arith.addf %104, %146 : vector<8x128xf32>
    %148 = vector.shape_cast %147 : vector<8x128xf32> to vector<1x8x128xf32>
    %cst_64 = arith.constant dense<0.000000e+00> : vector<1xf32>
    %149 = vector.multi_reduction <add>, %148, %cst_64 [1, 2] : vector<1x8x128xf32> to vector<1xf32>
    %150 = vector.shape_cast %149 : vector<1xf32> to vector<1x1x1xf32>
    %151 = vector.extract %150[0, 0, 0] : f32 from vector<1x1x1xf32>
    %cst_65 = arith.constant 1.000000e+00 : f32
    %cst_66 = arith.constant 0.000000e+00 : f32
    %152 = arith.select %67, %cst_65, %cst_66 : f32
    %cst_67 = arith.constant 0.000000e+00 : f32
    %153 = arith.addf %cst_67, %152 : f32
    %cst_68 = arith.constant 1.000000e+00 : f32
    %cst_69 = arith.constant 0.000000e+00 : f32
    %154 = arith.select %79, %cst_68, %cst_69 : f32
    %155 = arith.addf %153, %154 : f32
    %cst_70 = arith.constant 1.000000e+00 : f32
    %cst_71 = arith.constant 0.000000e+00 : f32
    %156 = arith.select %91, %cst_70, %cst_71 : f32
    %157 = arith.addf %155, %156 : f32
    %cst_72 = arith.constant 1.000000e+00 : f32
    %cst_73 = arith.constant 0.000000e+00 : f32
    %158 = arith.select %103, %cst_72, %cst_73 : f32
    %159 = arith.addf %157, %158 : f32
    %160 = arith.andi %67, %79 : i1
    %cst_74 = arith.constant 2.000000e+00 : f32
    %cst_75 = arith.constant 1.000000e+00 : f32
    %161 = arith.mulf %cst_74, %cst_75 : f32
    %162 = arith.subf %65, %77 : f32
    %163 = math.absf %162 : f32
    %164 = arith.subf %161, %163 : f32
    %cst_76 = arith.constant 0.000000e+00 : f32
    %165 = arith.maximumf %164, %cst_76 : f32
    %cst_77 = arith.constant 2.000000e+00 : f32
    %166 = arith.mulf %cst_77, %165 : f32
    %167 = arith.mulf %166, %165 : f32
    %cst_78 = arith.constant 0.000000e+00 : f32
    %168 = arith.select %160, %167, %cst_78 : f32
    %cst_79 = arith.constant 0.000000e+00 : f32
    %169 = arith.addf %cst_79, %168 : f32
    %cst_80 = arith.constant 2.000000e+00 : f32
    %cst_81 = arith.constant 0.000000e+00 : f32
    %170 = arith.select %160, %cst_80, %cst_81 : f32
    %cst_82 = arith.constant 0.000000e+00 : f32
    %171 = arith.addf %cst_82, %170 : f32
    %172 = arith.andi %67, %91 : i1
    %cst_83 = arith.constant 2.000000e+00 : f32
    %cst_84 = arith.constant 1.000000e+00 : f32
    %173 = arith.mulf %cst_83, %cst_84 : f32
    %174 = arith.subf %65, %89 : f32
    %175 = math.absf %174 : f32
    %176 = arith.subf %173, %175 : f32
    %cst_85 = arith.constant 0.000000e+00 : f32
    %177 = arith.maximumf %176, %cst_85 : f32
    %cst_86 = arith.constant 2.000000e+00 : f32
    %178 = arith.mulf %cst_86, %177 : f32
    %179 = arith.mulf %178, %177 : f32
    %cst_87 = arith.constant 0.000000e+00 : f32
    %180 = arith.select %172, %179, %cst_87 : f32
    %181 = arith.addf %169, %180 : f32
    %cst_88 = arith.constant 2.000000e+00 : f32
    %cst_89 = arith.constant 0.000000e+00 : f32
    %182 = arith.select %172, %cst_88, %cst_89 : f32
    %183 = arith.addf %171, %182 : f32
    %184 = arith.andi %67, %103 : i1
    %cst_90 = arith.constant 2.000000e+00 : f32
    %cst_91 = arith.constant 1.000000e+00 : f32
    %185 = arith.mulf %cst_90, %cst_91 : f32
    %186 = arith.subf %65, %101 : f32
    %187 = math.absf %186 : f32
    %188 = arith.subf %185, %187 : f32
    %cst_92 = arith.constant 0.000000e+00 : f32
    %189 = arith.maximumf %188, %cst_92 : f32
    %cst_93 = arith.constant 2.000000e+00 : f32
    %190 = arith.mulf %cst_93, %189 : f32
    %191 = arith.mulf %190, %189 : f32
    %cst_94 = arith.constant 0.000000e+00 : f32
    %192 = arith.select %184, %191, %cst_94 : f32
    %193 = arith.addf %181, %192 : f32
    %cst_95 = arith.constant 2.000000e+00 : f32
    %cst_96 = arith.constant 0.000000e+00 : f32
    %194 = arith.select %184, %cst_95, %cst_96 : f32
    %195 = arith.addf %183, %194 : f32
    %196 = arith.andi %79, %91 : i1
    %cst_97 = arith.constant 2.000000e+00 : f32
    %cst_98 = arith.constant 1.000000e+00 : f32
    %197 = arith.mulf %cst_97, %cst_98 : f32
    %198 = arith.subf %77, %89 : f32
    %199 = math.absf %198 : f32
    %200 = arith.subf %197, %199 : f32
    %cst_99 = arith.constant 0.000000e+00 : f32
    %201 = arith.maximumf %200, %cst_99 : f32
    %cst_100 = arith.constant 2.000000e+00 : f32
    %202 = arith.mulf %cst_100, %201 : f32
    %203 = arith.mulf %202, %201 : f32
    %cst_101 = arith.constant 0.000000e+00 : f32
    %204 = arith.select %196, %203, %cst_101 : f32
    %205 = arith.addf %193, %204 : f32
    %cst_102 = arith.constant 2.000000e+00 : f32
    %cst_103 = arith.constant 0.000000e+00 : f32
    %206 = arith.select %196, %cst_102, %cst_103 : f32
    %207 = arith.addf %195, %206 : f32
    %208 = arith.andi %79, %103 : i1
    %cst_104 = arith.constant 2.000000e+00 : f32
    %cst_105 = arith.constant 1.000000e+00 : f32
    %209 = arith.mulf %cst_104, %cst_105 : f32
    %210 = arith.subf %77, %101 : f32
    %211 = math.absf %210 : f32
    %212 = arith.subf %209, %211 : f32
    %cst_106 = arith.constant 0.000000e+00 : f32
    %213 = arith.maximumf %212, %cst_106 : f32
    %cst_107 = arith.constant 2.000000e+00 : f32
    %214 = arith.mulf %cst_107, %213 : f32
    %215 = arith.mulf %214, %213 : f32
    %cst_108 = arith.constant 0.000000e+00 : f32
    %216 = arith.select %208, %215, %cst_108 : f32
    %217 = arith.addf %205, %216 : f32
    %cst_109 = arith.constant 2.000000e+00 : f32
    %cst_110 = arith.constant 0.000000e+00 : f32
    %218 = arith.select %208, %cst_109, %cst_110 : f32
    %219 = arith.addf %207, %218 : f32
    %220 = arith.andi %91, %103 : i1
    %cst_111 = arith.constant 2.000000e+00 : f32
    %cst_112 = arith.constant 1.000000e+00 : f32
    %221 = arith.mulf %cst_111, %cst_112 : f32
    %222 = arith.subf %89, %101 : f32
    %223 = math.absf %222 : f32
    %224 = arith.subf %221, %223 : f32
    %cst_113 = arith.constant 0.000000e+00 : f32
    %225 = arith.maximumf %224, %cst_113 : f32
    %cst_114 = arith.constant 2.000000e+00 : f32
    %226 = arith.mulf %cst_114, %225 : f32
    %227 = arith.mulf %226, %225 : f32
    %cst_115 = arith.constant 0.000000e+00 : f32
    %228 = arith.select %220, %227, %cst_115 : f32
    %229 = arith.addf %217, %228 : f32
    %cst_116 = arith.constant 2.000000e+00 : f32
    %cst_117 = arith.constant 0.000000e+00 : f32
    %230 = arith.select %220, %cst_116, %cst_117 : f32
    %231 = arith.addf %219, %230 : f32
    %c0_i32 = arith.constant 0 : i32
    %232 = vector.broadcast %c0_i32 : i32 to vector<8x128xi32>
    %233 = arith.cmpi eq, %0, %232 : vector<8x128xi32>
    %c1_i32 = arith.constant 1 : i32
    %234 = vector.broadcast %c1_i32 : i32 to vector<8x128xi32>
    %235 = arith.cmpi eq, %0, %234 : vector<8x128xi32>
    %c2_i32 = arith.constant 2 : i32
    %236 = vector.broadcast %c2_i32 : i32 to vector<8x128xi32>
    %237 = arith.cmpi eq, %0, %236 : vector<8x128xi32>
    %c3_i32 = arith.constant 3 : i32
    %238 = vector.broadcast %c3_i32 : i32 to vector<8x128xi32>
    %239 = arith.cmpi eq, %0, %238 : vector<8x128xi32>
    %cst_118 = arith.constant 0.000000e+00 : f32
    %240 = vector.broadcast %231 : f32 to vector<8x128xf32>
    %241 = vector.broadcast %cst_118 : f32 to vector<8x128xf32>
    %242 = arith.select %239, %240, %241 : vector<8x128xi1>, vector<8x128xf32>
    %243 = vector.broadcast %229 : f32 to vector<8x128xf32>
    %244 = arith.select %237, %243, %242 : vector<8x128xi1>, vector<8x128xf32>
    %245 = vector.broadcast %159 : f32 to vector<8x128xf32>
    %246 = arith.select %235, %245, %244 : vector<8x128xi1>, vector<8x128xf32>
    %247 = vector.broadcast %151 : f32 to vector<8x128xf32>
    %248 = arith.select %233, %247, %246 : vector<8x128xi1>, vector<8x128xf32>
    %c0_119 = arith.constant 0 : index
    %c0_120 = arith.constant 0 : index
    %c0_121 = arith.constant 0 : index
    %249 = vector.load %arg3[%c0_119, %c0_120, %c0_121] : memref<1x8x128xf32, #tpu.memory_space<vmem>>, vector<1x8x128xf32>
    %250 = vector.shape_cast %249 : vector<1x8x128xf32> to vector<8x128xf32>
    %251 = vector.shape_cast %248 : vector<8x128xf32> to vector<1x8x128xf32>
    tpu.vector_store %arg3[%c0_119, %c0_120, %c0_121], %251 {strides = array<i32>} : memref<1x8x128xf32, #tpu.memory_space<vmem>>, vector<1x8x128xf32>,
    return
  }
  func.func @transform_0(%arg0: i32) -> (i32, i32, i32) {
    %c0_i32 = arith.constant 0 : i32
    %c0_i32_0 = arith.constant 0 : i32
    %c0_i32_1 = arith.constant 0 : i32
    return %arg0, %c0_i32, %c0_i32_0 : i32, i32, i32
  }
  func.func @transform_1(%arg0: i32) -> (i32, i32, i32) {
    %c0_i32 = arith.constant 0 : i32
    %c0_i32_0 = arith.constant 0 : i32
    %c0_i32_1 = arith.constant 0 : i32
    return %arg0, %c0_i32, %c0_i32_0 : i32, i32, i32
  }
  func.func @transform_2(%arg0: i32) -> (i32, i32, i32) {
    %c0_i32 = arith.constant 0 : i32
    %c0_i32_0 = arith.constant 0 : i32
    %c0_i32_1 = arith.constant 0 : i32
    return %arg0, %c0_i32, %c0_i32_0 : i32, i32, i32
  }
}

</mosaic_0001>

<llo_original>
// kernel: push_pull_loss.1
$region0: #{push_pull_loss.1}
  #allocation0 [shape = 'u32[]', space=smem, size = 0x4, offset = 0x4, fixed_abs, tag = 'smem constant byte address 0x4 - core index']
  #allocation1 [shape = 'u32[72,128]{1,0:T(1,128)}', space=vmem, size = 0x9000, scoped, tag = 'internal scratch']
  %s0 = inlined_call_operand.vmem [shape: f32[2,32,128], index: 0, kind: input, shape index: {}]
  %s1 = inlined_call_operand.vmem [shape: s8[2,32,128], index: 1, kind: input, shape index: {}]
  %s2 = inlined_call_operand.vmem [shape: f32[2,8,128], index: 2, kind: output, shape index: {}]
  %s3 = sld [smem:[#allocation0]]
  $region41: #{push_pull_loss.1} parent=0
    _
  %s5 = ssub.s32 1, %s3
  %s6 = scalar_select 0, %s5, %s3
  loop: start=0, step=1, limit=4
  $region2: #{push_pull_loss.1} parent=0 // loop_pre_header
    _
  $region3: #{push_pull_loss.1} parent=0 // loop_header
    %s8 = sphi 0, %s12
    %p9 = scmp.ge.s32.totalorder %s8, 4
    %s18 = sphi 0, %s20
    %s21 = sphi 0, %s18
    %s22 = sphi 0, %s21
    %s38 = sphi 0, %s22
    %s44 = sphi 0, %s46
    %s47 = sphi 0, %s44
    %s48 = sphi 0, %s47
    %s64 = sphi 0, %s48
    %s70 = sphi 0, %s72
    %s73 = sphi 0, %s70
    %s74 = sphi 0, %s73
    %s90 = sphi 0, %s74
  $region4: #{push_pull_loss.1} parent=0 // loop_header_branch
    %11 = sbr.rel (%p9) target = $region8
  $region5: #{push_pull_loss.1} parent=0 // loop_body
    %s13 = ssub.s32 %s8, 1
    %s14 = ssub.s32 %s8, 2
    %s15 = sadd.s32 %s8, 1
    %s16 = ssub.s32 %s8, %s15
    %p17 = scmp.eq.s32.totalorder %s16, 0
    %s19 = sadd.s32 %s18, 1
    %s20 = scalar_select %p17, %s18, %s19
    %p23 = pneg %p17
    %p24 = scmp.eq.s32.totalorder %s8, 1
    %p25 = por %p23, %p24
    %p26 = scmp.ne.s32.totalorder %s18, %s21
    %p27 = scmp.eq.s32.totalorder %s8, 0
    %p28 = por %p26, %p27
    %p29 = scmp.ne.s32.totalorder %s18, %s21
    %p30 = scmp.eq.s32.totalorder %s13, 1
    %p31 = por %p29, %p30
    %p32 = scmp.ne.s32.totalorder %s21, %s22
    %p33 = scmp.eq.s32.totalorder %s13, 0
    %p34 = por %p32, %p33
    %p35 = scmp.ne.s32.totalorder %s21, %s22
    %p36 = scmp.eq.s32.totalorder %s14, 1
    %p37 = por %p35, %p36
    %p39 = scmp.ne.s32.totalorder %s22, %s38
    %p40 = scmp.eq.s32.totalorder %s14, 0
    %p41 = por %p39, %p40
    %s42 = ssub.s32 %s8, %s15
    %p43 = scmp.eq.s32.totalorder %s42, 0
    %s45 = sadd.s32 %s44, 1
    %s46 = scalar_select %p43, %s44, %s45
    %p49 = pneg %p43
    %p50 = scmp.eq.s32.totalorder %s8, 1
    %p51 = por %p49, %p50
    %p52 = scmp.ne.s32.totalorder %s44, %s47
    %p53 = scmp.eq.s32.totalorder %s8, 0
    %p54 = por %p52, %p53
    %p55 = scmp.ne.s32.totalorder %s44, %s47
    %p56 = scmp.eq.s32.totalorder %s13, 1
    %p57 = por %p55, %p56
    %p58 = scmp.ne.s32.totalorder %s47, %s48
    %p59 = scmp.eq.s32.totalorder %s13, 0
    %p60 = por %p58, %p59
    %p61 = scmp.ne.s32.totalorder %s47, %s48
    %p62 = scmp.eq.s32.totalorder %s14, 1
    %p63 = por %p61, %p62
    %p65 = scmp.ne.s32.totalorder %s48, %s64
    %p66 = scmp.eq.s32.totalorder %s14, 0
    %p67 = por %p65, %p66
    %s68 = ssub.s32 %s8, %s15
    %p69 = scmp.eq.s32.totalorder %s68, 0
    %s71 = sadd.s32 %s70, 1
    %s72 = scalar_select %p69, %s70, %s71
    %p75 = pneg %p69
    %p76 = scmp.eq.s32.totalorder %s8, 1
    %p77 = por %p75, %p76
    %p78 = scmp.ne.s32.totalorder %s70, %s73
    %p79 = scmp.eq.s32.totalorder %s8, 0
    %p80 = por %p78, %p79
    %p81 = scmp.ne.s32.totalorder %s70, %s73
    %p82 = scmp.eq.s32.totalorder %s13, 1
    %p83 = por %p81, %p82
    %p84 = scmp.ne.s32.totalorder %s73, %s74
    %p85 = scmp.eq.s32.totalorder %s13, 0
    %p86 = por %p84, %p85
    %p87 = scmp.ne.s32.totalorder %s73, %s74
    %p88 = scmp.eq.s32.totalorder %s14, 1
    %p89 = por %p87, %p88
    %p91 = scmp.ne.s32.totalorder %s74, %s90
    %p92 = scmp.eq.s32.totalorder %s14, 0
    %p93 = por %p91, %p92
    %p94 = scmp.le.s32.totalorder 1, %s8
    %p95 = scmp.lt.s32.totalorder %s8, 3
    %p96 = pnand %p94, %p95
    %p97 = pneg %p96
    // Predicated region
    $region9: #{push_pull_loss.1} parent=5 // pred_check
      _
    $region10: #{push_pull_loss.1} parent=5 // pred_check_branch
      %99 = sbr.rel (%p96) target = $region12
    $region11: #{push_pull_loss.1} parent=5 // pred_region
      %s100 = ssub.s32 %s8, 1
    $region12: #{push_pull_loss.1} parent=5 // pred_fallthru
      _
    %p101 = scmp.lt.s32.totalorder %s8, 2
    // Predicated region
    $region13: #{push_pull_loss.1} parent=5 // pred_check
      %p102 = pneg %p101
    $region14: #{push_pull_loss.1} parent=5 // pred_check_branch
      %104 = sbr.rel (%p102) target = $region16
    $region15: #{push_pull_loss.1} parent=5 // pred_region
      // Predicated region
      $region17: #{push_pull_loss.1} parent=15 // pred_check
        %p105 = pneg %p28
      $region18: #{push_pull_loss.1} parent=15 // pred_check_branch
        %107 = sbr.rel (%p105) target = $region20
      $region19: #{push_pull_loss.1} parent=15 // pred_region
        %p108 = scmp.lt.s32.totalorder %s8, 1
        %s109 = scalar_select %p108, %s8, 1
        %s110 = smul.addr %s109, 4
        %s111 = smul.addr %s110, 8
        %s112 = scalar_lea.vmem %s0, %s111
      $region20: #{push_pull_loss.1} parent=15 // pred_fallthru
        _
      // Predicated region
      $region21: #{push_pull_loss.1} parent=15 // pred_check
        %p113 = pneg %p54
      $region22: #{push_pull_loss.1} parent=15 // pred_check_branch
        %115 = sbr.rel (%p113) target = $region24
      $region23: #{push_pull_loss.1} parent=15 // pred_region
        %p116 = scmp.lt.s32.totalorder %s8, 1
        %s117 = scalar_select %p116, %s8, 1
        %s118 = smul.addr %s117, 8
        %s119 = scalar_lea.vmem %s1, %s118
      $region24: #{push_pull_loss.1} parent=15 // pred_fallthru
        _
    $region16: #{push_pull_loss.1} parent=5 // pred_fallthru
      _
    %p120 = scmp.le.s32.totalorder 1, %s8
    %p121 = scmp.lt.s32.totalorder %s8, 3
    %p122 = pnand %p120, %p121
    %p123 = pneg %p122
    // Predicated region
    $region25: #{push_pull_loss.1} parent=5 // pred_check
      _
    $region26: #{push_pull_loss.1} parent=5 // pred_check_branch
      %125 = sbr.rel (%p122) target = $region28
    $region27: #{push_pull_loss.1} parent=5 // pred_region
      %s126 = ssub.s32 %s8, 1
      %p127 = scmp.lt.s32.totalorder %s13, 1
      %s128 = scalar_select %p127, %s13, 1
      %s129 = smul.addr %s128, 4
      %s130 = smul.addr %s129, 8
      %s131 = scalar_lea.vmem %s0, %s130
      %p132 = pneg %p34
      %p133 = pneg %p31
      %p134 = scmp.lt.s32.totalorder %s13, 1
      %s135 = scalar_select %p134, %s13, 1
      %s136 = smul.addr %s135, 8
      %s137 = scalar_lea.vmem %s1, %s136
      %p138 = pneg %p60
      %p139 = pneg %p57
      %p140 = pneg %p86
      %p141 = pneg %p83
      %p142 = scmp.lt.s32.totalorder %s13, 1
      %s143 = scalar_select %p142, %s13, 1
      %s144 = smul.addr %s143, 8
      %s145 = scalar_lea.vmem %s2, %s144
      %p146 = scmp.lt.s32.totalorder %s13, 1
      %s147 = scalar_select %p146, %s13, 1
      %s148 = smul.addr %s147, 4
      %s149 = smul.addr %s148, 8
      %s150 = scalar_lea.vmem %s0, %s149
      %p151 = scmp.lt.s32.totalorder %s13, 1
      %s152 = scalar_select %p151, %s13, 1
      %s153 = smul.addr %s152, 8
      %s154 = scalar_lea.vmem %s1, %s153
      %p155 = scmp.lt.s32.totalorder %s13, 1
      %s156 = scalar_select %p155, %s13, 1
      %s157 = smul.addr %s156, 8
      %s158 = scalar_lea.vmem %s2, %s157
      %v159 = vlaneseq
      %v160 = vshrl.u32 %v159, 7
      %v161 = vld [vmem:[%s150] sm:$0xff]
      %v162 = vld [vmem:[%s150 + $0x8] sm:$0xff]
      %v163 = vld [vmem:[%s150 + $0x10] sm:$0xff]
      %v164 = vld [vmem:[%s150 + $0x18] sm:$0xff]
      %v165 = vld [vmem:[%s154] sm:$0xff]
      %v166 = vunpack.c.0.s8 %v165
      %v167 = vunpack.c.1.s8 %v165
      %v168 = vunpack.c.2.s8 %v165
      %v169 = vunpack.c.3.s8 %v165
      %v170 = vcvt.s32.f32 %v166
      %v171 = vcvt.s32.f32 %v167
      %v172 = vcvt.s32.f32 %v168
      %v173 = vcvt.s32.f32 %v169
      %vm174 = vcmp.eq.f32.partialorder %v170, 1.0
      %vm175 = vcmp.eq.f32.partialorder %v171, 1.0
      %vm176 = vcmp.eq.f32.partialorder %v172, 1.0
      %vm177 = vcmp.eq.f32.partialorder %v173, 1.0
      %v178 = vsel %vm174, 1, 0
      %v179 = vsel %vm175, 1, 0
      %v180 = vsel %vm176, 1, 0
      %v181 = vsel %vm177, 1, 0
      %v182 = vcvt.s32.f32 %v178
      %v183 = vcvt.s32.f32 %v179
      %v184 = vcvt.s32.f32 %v180
      %v185 = vcvt.s32.f32 %v181
      %v186 = vadd.f32 %v182, %v183
      %v187 = vadd.f32 %v186, %v184
      %v188 = vadd.f32 %v187, %v185
      %v189 = vadd.f32 %v188, 0.0
      %v190 = vsel %vm174, %v161, 0.0
      %v191 = vsel %vm175, %v162, 0.0
      %v192 = vsel %vm176, %v163, 0.0
      %v193 = vsel %vm177, %v164, 0.0
      %v194 = vadd.f32 %v190, %v191
      %v195 = vadd.f32 %v194, %v192
      %v196 = vadd.f32 %v195, %v193
      %v197 = vadd.f32 %v196, 0.0
      %vm198 = vcmp.eq.f32.partialorder %v170, 2.0
      %vm199 = vcmp.eq.f32.partialorder %v171, 2.0
      %vm200 = vcmp.eq.f32.partialorder %v172, 2.0
      %vm201 = vcmp.eq.f32.partialorder %v173, 2.0
      %v202 = vsel %vm198, 1, 0
      %v203 = vsel %vm199, 1, 0
      %v204 = vsel %vm200, 1, 0
      %v205 = vsel %vm201, 1, 0
      %v206 = vcvt.s32.f32 %v202
      %v207 = vcvt.s32.f32 %v203
      %v208 = vcvt.s32.f32 %v204
      %v209 = vcvt.s32.f32 %v205
      %v210 = vadd.f32 %v206, %v207
      %v211 = vadd.f32 %v210, %v208
      %v212 = vadd.f32 %v211, %v209
      %v213 = vadd.f32 %v212, 0.0
      %v214 = vsel %vm198, %v161, 0.0
      %v215 = vsel %vm199, %v162, 0.0
      %v216 = vsel %vm200, %v163, 0.0
      %v217 = vsel %vm201, %v164, 0.0
      %v218 = vadd.f32 %v214, %v215
      %v219 = vadd.f32 %v218, %v216
      %v220 = vadd.f32 %v219, %v217
      %v221 = vadd.f32 %v220, 0.0
      %vm222 = vcmp.eq.f32.partialorder %v170, 3.0
      %vm223 = vcmp.eq.f32.partialorder %v171, 3.0
      %vm224 = vcmp.eq.f32.partialorder %v172, 3.0
      %vm225 = vcmp.eq.f32.partialorder %v173, 3.0
      %v226 = vsel %vm222, 1, 0
      %v227 = vsel %vm223, 1, 0
      %v228 = vsel %vm224, 1, 0
      %v229 = vsel %vm225, 1, 0
      %v230 = vcvt.s32.f32 %v226
      %v231 = vcvt.s32.f32 %v227
      %v232 = vcvt.s32.f32 %v228
      %v233 = vcvt.s32.f32 %v229
      %v234 = vadd.f32 %v230, %v231
      %v235 = vadd.f32 %v234, %v232
      %v236 = vadd.f32 %v235, %v233
      %v237 = vadd.f32 %v236, 0.0
      %v238 = vsel %vm222, %v161, 0.0
      %v239 = vsel %vm223, %v162, 0.0
      %v240 = vsel %vm224, %v163, 0.0
      %v241 = vsel %vm225, %v164, 0.0
      %v242 = vadd.f32 %v238, %v239
      %v243 = vadd.f32 %v242, %v240
      %v244 = vadd.f32 %v243, %v241
      %v245 = vadd.f32 %v244, 0.0
      %vm246 = vcmp.eq.f32.partialorder %v170, 4.0
      %vm247 = vcmp.eq.f32.partialorder %v171, 4.0
      %vm248 = vcmp.eq.f32.partialorder %v172, 4.0
      %vm249 = vcmp.eq.f32.partialorder %v173, 4.0
      %v250 = vsel %vm246, 1, 0
      %v251 = vsel %vm247, 1, 0
      %v252 = vsel %vm248, 1, 0
      %v253 = vsel %vm249, 1, 0
      %v254 = vcvt.s32.f32 %v250
      %v255 = vcvt.s32.f32 %v251
      %v256 = vcvt.s32.f32 %v252
      %v257 = vcvt.s32.f32 %v253
      %v258 = vadd.f32 %v254, %v255
      %v259 = vadd.f32 %v258, %v256
      %v260 = vadd.f32 %v259, %v257
      %v261 = vadd.f32 %v260, 0.0
      %v262 = vsel %vm246, %v161, 0.0
      %v263 = vsel %vm247, %v162, 0.0
      %v264 = vsel %vm248, %v163, 0.0
      %v265 = vsel %vm249, %v164, 0.0
      %v266 = vadd.f32 %v262, %v263
      %v267 = vadd.f32 %v266, %v264
      %v268 = vadd.f32 %v267, %v265
      %v269 = vadd.f32 %v268, 0.0
      %270 = vadd.xlane.f32.xlu0 %v189
      %v271 = vpop.xlane.xlu0 %270
      %v272 = vrot.slane %v271, 4
      %v273 = vadd.f32 %v271, %v272
      %v274 = vrot.slane %v273, 2
      %v275 = vadd.f32 %v273, %v274
      %v276 = vrot.slane %v275, 1
      %v277 = vadd.f32 %v275, %v276
      %s278 = vtos %v277
      %279 = vadd.xlane.f32.xlu0 %v197
      %v280 = vpop.xlane.xlu0 %279
      %v281 = vrot.slane %v280, 4
      %v282 = vadd.f32 %v280, %v281
      %v283 = vrot.slane %v282, 2
      %v284 = vadd.f32 %v282, %v283
      %v285 = vrot.slane %v284, 1
      %v286 = vadd.f32 %v284, %v285
      %s287 = vtos %v286
      %s288 = smax.f32 %s278, 1.0
      %v289 = vstv %s288
      %v290 = vrcp.pop %v289
      %v291 = vmul.f32 %v289, %v290
      %v292 = vsub.f32 1.0, %v291
      %v293 = vmul.f32 %v290, %v292
      %v294 = vadd.f32 %v290, %v293
      %vm295 = vweird.f32 %v289
      %vm296 = vweird.f32 %v290
      %vm297 = vmor %vm295, %vm296
      %v298 = vsel %vm297, %v290, %v294
      %v299 = vand.u32 2147483647, %v289
      %vm300 = vcmp.eq.f32.partialorder %v299, 8.507059e+37
      %v301 = vand.u32 %v289, 2147483648
      %v302 = vor.u32 1.1754944e-38, %v301
      %v303 = vsel %vm300, %v302, %v298
      %s304 = vtos %v303
      %s305 = smul.f32 %s287, %s304
      %v306 = vstv %s288
      %v307 = vrcp.pop %v306
      %v308 = vmul.f32 %v306, %v307
      %v309 = vsub.f32 1.0, %v308
      %v310 = vmul.f32 %v307, %v309
      %v311 = vadd.f32 %v307, %v310
      %vm312 = vweird.f32 %v306
      %vm313 = vweird.f32 %v307
      %vm314 = vmor %vm312, %vm313
      %v315 = vsel %vm314, %v307, %v311
      %v316 = vand.u32 2147483647, %v306
      %vm317 = vcmp.eq.f32.partialorder %v316, 8.507059e+37
      %v318 = vand.u32 %v306, 2147483648
      %v319 = vor.u32 1.1754944e-38, %v318
      %v320 = vsel %vm317, %v319, %v315
      %s321 = vtos %v320
      %p322 = scmp.gt.f32.partialorder %s278, 0.0
      %323 = vadd.xlane.f32.xlu0 %v213
      %v324 = vpop.xlane.xlu0 %323
      %v325 = vrot.slane %v324, 4
      %v326 = vadd.f32 %v324, %v325
      %v327 = vrot.slane %v326, 2
      %v328 = vadd.f32 %v326, %v327
      %v329 = vrot.slane %v328, 1
      %v330 = vadd.f32 %v328, %v329
      %s331 = vtos %v330
      %332 = vadd.xlane.f32.xlu0 %v221
      %v333 = vpop.xlane.xlu0 %332
      %v334 = vrot.slane %v333, 4
      %v335 = vadd.f32 %v333, %v334
      %v336 = vrot.slane %v335, 2
      %v337 = vadd.f32 %v335, %v336
      %v338 = vrot.slane %v337, 1
      %v339 = vadd.f32 %v337, %v338
      %s340 = vtos %v339
      %s341 = smax.f32 %s331, 1.0
      %v342 = vstv %s341
      %v343 = vrcp.pop %v342
      %v344 = vmul.f32 %v342, %v343
      %v345 = vsub.f32 1.0, %v344
      %v346 = vmul.f32 %v343, %v345
      %v347 = vadd.f32 %v343, %v346
      %vm348 = vweird.f32 %v342
      %vm349 = vweird.f32 %v343
      %vm350 = vmor %vm348, %vm349
      %v351 = vsel %vm350, %v343, %v347
      %v352 = vand.u32 2147483647, %v342
      %vm353 = vcmp.eq.f32.partialorder %v352, 8.507059e+37
      %v354 = vand.u32 %v342, 2147483648
      %v355 = vor.u32 1.1754944e-38, %v354
      %v356 = vsel %vm353, %v355, %v351
      %s357 = vtos %v356
      %s358 = smul.f32 %s340, %s357
      %v359 = vstv %s341
      %v360 = vrcp.pop %v359
      %v361 = vmul.f32 %v359, %v360
      %v362 = vsub.f32 1.0, %v361
      %v363 = vmul.f32 %v360, %v362
      %v364 = vadd.f32 %v360, %v363
      %vm365 = vweird.f32 %v359
      %vm366 = vweird.f32 %v360
      %vm367 = vmor %vm365, %vm366
      %v368 = vsel %vm367, %v360, %v364
      %v369 = vand.u32 2147483647, %v359
      %vm370 = vcmp.eq.f32.partialorder %v369, 8.507059e+37
      %v371 = vand.u32 %v359, 2147483648
      %v372 = vor.u32 1.1754944e-38, %v371
      %v373 = vsel %vm370, %v372, %v368
      %s374 = vtos %v373
      %p375 = scmp.gt.f32.partialorder %s331, 0.0
      %376 = vadd.xlane.f32.xlu0 %v237
      %v377 = vpop.xlane.xlu0 %376
      %v378 = vrot.slane %v377, 4
      %v379 = vadd.f32 %v377, %v378
      %v380 = vrot.slane %v379, 2
      %v381 = vadd.f32 %v379, %v380
      %v382 = vrot.slane %v381, 1
      %v383 = vadd.f32 %v381, %v382
      %s384 = vtos %v383
      %385 = vadd.xlane.f32.xlu0 %v245
      %v386 = vpop.xlane.xlu0 %385
      %v387 = vrot.slane %v386, 4
      %v388 = vadd.f32 %v386, %v387
      %v389 = vrot.slane %v388, 2
      %v390 = vadd.f32 %v388, %v389
      %v391 = vrot.slane %v390, 1
      %v392 = vadd.f32 %v390, %v391
      %s393 = vtos %v392
      %s394 = smax.f32 %s384, 1.0
      %v395 = vstv %s394
      %v396 = vrcp.pop %v395
      %v397 = vmul.f32 %v395, %v396
      %v398 = vsub.f32 1.0, %v397
      %v399 = vmul.f32 %v396, %v398
      %v400 = vadd.f32 %v396, %v399
      %vm401 = vweird.f32 %v395
      %vm402 = vweird.f32 %v396
      %vm403 = vmor %vm401, %vm402
      %v404 = vsel %vm403, %v396, %v400
      %v405 = vand.u32 2147483647, %v395
      %vm406 = vcmp.eq.f32.partialorder %v405, 8.507059e+37
      %v407 = vand.u32 %v395, 2147483648
      %v408 = vor.u32 1.1754944e-38, %v407
      %v409 = vsel %vm406, %v408, %v404
      %s410 = vtos %v409
      %s411 = smul.f32 %s393, %s410
      %v412 = vstv %s394
      %v413 = vrcp.pop %v412
      %v414 = vmul.f32 %v412, %v413
      %v415 = vsub.f32 1.0, %v414
      %v416 = vmul.f32 %v413, %v415
      %v417 = vadd.f32 %v413, %v416
      %vm418 = vweird.f32 %v412
      %vm419 = vweird.f32 %v413
      %vm420 = vmor %vm418, %vm419
      %v421 = vsel %vm420, %v413, %v417
      %v422 = vand.u32 2147483647, %v412
      %vm423 = vcmp.eq.f32.partialorder %v422, 8.507059e+37
      %v424 = vand.u32 %v412, 2147483648
      %v425 = vor.u32 1.1754944e-38, %v424
      %v426 = vsel %vm423, %v425, %v421
      %s427 = vtos %v426
      %p428 = scmp.gt.f32.partialorder %s384, 0.0
      %429 = vadd.xlane.f32.xlu0 %v261
      %v430 = vpop.xlane.xlu0 %429
      %v431 = vrot.slane %v430, 4
      %v432 = vadd.f32 %v430, %v431
      %v433 = vrot.slane %v432, 2
      %v434 = vadd.f32 %v432, %v433
      %v435 = vrot.slane %v434, 1
      %v436 = vadd.f32 %v434, %v435
      %s437 = vtos %v436
      %438 = vadd.xlane.f32.xlu0 %v269
      %v439 = vpop.xlane.xlu0 %438
      %v440 = vrot.slane %v439, 4
      %v441 = vadd.f32 %v439, %v440
      %v442 = vrot.slane %v441, 2
      %v443 = vadd.f32 %v441, %v442
      %v444 = vrot.slane %v443, 1
      %v445 = vadd.f32 %v443, %v444
      %s446 = vtos %v445
      %s447 = smax.f32 %s437, 1.0
      %v448 = vstv %s447
      %v449 = vrcp.pop %v448
      %v450 = vmul.f32 %v448, %v449
      %v451 = vsub.f32 1.0, %v450
      %v452 = vmul.f32 %v449, %v451
      %v453 = vadd.f32 %v449, %v452
      %vm454 = vweird.f32 %v448
      %vm455 = vweird.f32 %v449
      %vm456 = vmor %vm454, %vm455
      %v457 = vsel %vm456, %v449, %v453
      %v458 = vand.u32 2147483647, %v448
      %vm459 = vcmp.eq.f32.partialorder %v458, 8.507059e+37
      %v460 = vand.u32 %v448, 2147483648
      %v461 = vor.u32 1.1754944e-38, %v460
      %v462 = vsel %vm459, %v461, %v457
      %s463 = vtos %v462
      %s464 = smul.f32 %s446, %s463
      %v465 = vstv %s447
      %v466 = vrcp.pop %v465
      %v467 = vmul.f32 %v465, %v466
      %v468 = vsub.f32 1.0, %v467
      %v469 = vmul.f32 %v466, %v468
      %v470 = vadd.f32 %v466, %v469
      %vm471 = vweird.f32 %v465
      %vm472 = vweird.f32 %v466
      %vm473 = vmor %vm471, %vm472
      %v474 = vsel %vm473, %v466, %v470
      %v475 = vand.u32 2147483647, %v465
      %vm476 = vcmp.eq.f32.partialorder %v475, 8.507059e+37
      %v477 = vand.u32 %v465, 2147483648
      %v478 = vor.u32 1.1754944e-38, %v477
      %v479 = vsel %vm476, %v478, %v474
      %s480 = vtos %v479
      %p481 = scmp.gt.f32.partialorder %s437, 0.0
      %v482 = vstv %s305
      %v483 = vsel %vm174, %v482, 0.0
      %v484 = vsel %vm175, %v482, 0.0
      %v485 = vsel %vm176, %v482, 0.0
      %v486 = vsel %vm177, %v482, 0.0
      %v487 = vstv %s321
      %v488 = vsel %vm174, %v487, 0.0
      %v489 = vsel %vm175, %v487, 0.0
      %v490 = vsel %vm176, %v487, 0.0
      %v491 = vsel %vm177, %v487, 0.0
      %v492 = vstv %s358
      %v493 = vsel %vm198, %v492, %v483
      %v494 = vsel %vm199, %v492, %v484
      %v495 = vsel %vm200, %v492, %v485
      %v496 = vsel %vm201, %v492, %v486
      %v497 = vstv %s374
      %v498 = vsel %vm198, %v497, %v488
      %v499 = vsel %vm199, %v497, %v489
      %v500 = vsel %vm200, %v497, %v490
      %v501 = vsel %vm201, %v497, %v491
      %v502 = vstv %s411
      %v503 = vsel %vm222, %v502, %v493
      %v504 = vsel %vm223, %v502, %v494
      %v505 = vsel %vm224, %v502, %v495
      %v506 = vsel %vm225, %v502, %v496
      %v507 = vstv %s427
      %v508 = vsel %vm222, %v507, %v498
      %v509 = vsel %vm223, %v507, %v499
      %v510 = vsel %vm224, %v507, %v500
      %v511 = vsel %vm225, %v507, %v501
      %v512 = vstv %s464
      %v513 = vsel %vm246, %v512, %v503
      %v514 = vsel %vm247, %v512, %v504
      %v515 = vsel %vm248, %v512, %v505
      %v516 = vsel %vm249, %v512, %v506
      %v517 = vstv %s480
      %v518 = vsel %vm246, %v517, %v508
      %v519 = vsel %vm247, %v517, %v509
      %v520 = vsel %vm248, %v517, %v510
      %v521 = vsel %vm249, %v517, %v511
      %v522 = vsub.f32 %v161, %v513
      %v523 = vsub.f32 %v162, %v514
      %v524 = vsub.f32 %v163, %v515
      %v525 = vsub.f32 %v164, %v516
      %v526 = vand.u32 2147483647, %v522
      %v527 = vand.u32 2147483647, %v523
      %v528 = vand.u32 2147483647, %v524
      %v529 = vand.u32 2147483647, %v525
      %v530 = vsub.f32 %v526, 0.1
      %v531 = vsub.f32 %v527, 0.1
      %v532 = vsub.f32 %v528, 0.1
      %v533 = vsub.f32 %v529, 0.1
      %v534 = vmax.f32 %v530, 0.0
      %v535 = vmax.f32 %v531, 0.0
      %v536 = vmax.f32 %v532, 0.0
      %v537 = vmax.f32 %v533, 0.0
      %v538 = vmul.f32 %v534, %v534
      %v539 = vmul.f32 %v535, %v535
      %v540 = vmul.f32 %v536, %v536
      %v541 = vmul.f32 %v537, %v537
      %v542 = vmul.f32 %v538, %v518
      %v543 = vmul.f32 %v539, %v519
      %v544 = vmul.f32 %v540, %v520
      %v545 = vmul.f32 %v541, %v521
      %v546 = vadd.f32 %v542, %v543
      %v547 = vadd.f32 %v546, %v544
      %v548 = vadd.f32 %v547, %v545
      %v549 = vadd.f32 %v548, 0.0
      %550 = vadd.xlane.f32.xlu0 %v549
      %v551 = vpop.xlane.xlu0 %550
      %v552 = vrot.slane %v551, 4
      %v553 = vadd.f32 %v551, %v552
      %v554 = vrot.slane %v553, 2
      %v555 = vadd.f32 %v553, %v554
      %v556 = vrot.slane %v555, 1
      %v557 = vadd.f32 %v555, %v556
      %s558 = vtos %v557
      %s559 = scalar_select %p322, 1.0, 0.0
      %s560 = sadd.f32 %s559, 0.0
      %s561 = scalar_select %p375, 1.0, 0.0
      %s562 = sadd.f32 %s560, %s561
      %s563 = scalar_select %p428, 1.0, 0.0
      %s564 = sadd.f32 %s562, %s563
      %s565 = scalar_select %p481, 1.0, 0.0
      %s566 = sadd.f32 %s564, %s565
      %p567 = pnand %p322, %p375
      %p568 = pneg %p567
      %s569 = ssub.f32 %s305, %s358
      %s570 = sand.u32 2147483647, %s569
      %s571 = ssub.f32 2.0, %s570
      %s572 = smax.f32 %s571, 0.0
      %s573 = smul.f32 %s572, 2.0
      %s574 = smul.f32 %s573, %s572
      %s575 = scalar_select %p568, %s574, 0.0
      %s576 = sadd.f32 %s575, 0.0
      %s577 = scalar_select %p568, 2.0, 0.0
      %s578 = sadd.f32 %s577, 0.0
      %p579 = pnand %p322, %p428
      %p580 = pneg %p579
      %s581 = ssub.f32 %s305, %s411
      %s582 = sand.u32 2147483647, %s581
      %s583 = ssub.f32 2.0, %s582
      %s584 = smax.f32 %s583, 0.0
      %s585 = smul.f32 %s584, 2.0
      %s586 = smul.f32 %s585, %s584
      %s587 = scalar_select %p580, %s586, 0.0
      %s588 = sadd.f32 %s576, %s587
      %s589 = scalar_select %p580, 2.0, 0.0
      %s590 = sadd.f32 %s578, %s589
      %p591 = pnand %p322, %p481
      %p592 = pneg %p591
      %s593 = ssub.f32 %s305, %s464
      %s594 = sand.u32 2147483647, %s593
      %s595 = ssub.f32 2.0, %s594
      %s596 = smax.f32 %s595, 0.0
      %s597 = smul.f32 %s596, 2.0
      %s598 = smul.f32 %s597, %s596
      %s599 = scalar_select %p592, %s598, 0.0
      %s600 = sadd.f32 %s588, %s599
      %s601 = scalar_select %p592, 2.0, 0.0
      %s602 = sadd.f32 %s590, %s601
      %p603 = pnand %p375, %p428
      %p604 = pneg %p603
      %s605 = ssub.f32 %s358, %s411
      %s606 = sand.u32 2147483647, %s605
      %s607 = ssub.f32 2.0, %s606
      %s608 = smax.f32 %s607, 0.0
      %s609 = smul.f32 %s608, 2.0
      %s610 = smul.f32 %s609, %s608
      %s611 = scalar_select %p604, %s610, 0.0
      %s612 = sadd.f32 %s600, %s611
      %s613 = scalar_select %p604, 2.0, 0.0
      %s614 = sadd.f32 %s602, %s613
      %p615 = pnand %p375, %p481
      %p616 = pneg %p615
      %s617 = ssub.f32 %s358, %s464
      %s618 = sand.u32 2147483647, %s617
      %s619 = ssub.f32 2.0, %s618
      %s620 = smax.f32 %s619, 0.0
      %s621 = smul.f32 %s620, 2.0
      %s622 = smul.f32 %s621, %s620
      %s623 = scalar_select %p616, %s622, 0.0
      %s624 = sadd.f32 %s612, %s623
      %s625 = scalar_select %p616, 2.0, 0.0
      %s626 = sadd.f32 %s614, %s625
      %p627 = pnand %p428, %p481
      %p628 = pneg %p627
      %s629 = ssub.f32 %s411, %s464
      %s630 = sand.u32 2147483647, %s629
      %s631 = ssub.f32 2.0, %s630
      %s632 = smax.f32 %s631, 0.0
      %s633 = smul.f32 %s632, 2.0
      %s634 = smul.f32 %s633, %s632
      %s635 = scalar_select %p628, %s634, 0.0
      %s636 = sadd.f32 %s624, %s635
      %s637 = scalar_select %p628, 2.0, 0.0
      %s638 = sadd.f32 %s626, %s637
      %vm639 = vcmp.eq.s32.totalorder %v160, 0
      %vm640 = vcmp.eq.s32.totalorder %v160, 1
      %vm641 = vcmp.eq.s32.totalorder %v160, 2
      %vm642 = vcmp.eq.s32.totalorder %v160, 3
      %v643 = vstv %s638
      %v644 = vsel %vm642, %v643, 0.0
      %v645 = vstv %s636
      %v646 = vsel %vm641, %v645, %v644
      %v647 = vstv %s566
      %v648 = vsel %vm640, %v647, %v646
      %v649 = vstv %s558
      %v650 = vsel %vm639, %v649, %v648
      %651 = vst [vmem:[%s158] sm:$0xff] %v650
      %p652 = scmp.lt.s32.totalorder %s13, 1
      %s653 = scalar_select %p652, %s13, 1
      %s654 = smul.addr %s653, 8
      %s655 = scalar_lea.vmem %s2, %s654
      // Predicated region
      $region29: #{push_pull_loss.1} parent=27 // pred_check
        %p656 = pneg %p83
      $region30: #{push_pull_loss.1} parent=27 // pred_check_branch
        %658 = sbr.rel (%p656) target = $region32
      $region31: #{push_pull_loss.1} parent=27 // pred_region
        _
      $region32: #{push_pull_loss.1} parent=27 // pred_fallthru
        _
    $region28: #{push_pull_loss.1} parent=5 // pred_fallthru
      _
    %p659 = scmp.le.s32.totalorder 2, %s8
    // Predicated region
    $region33: #{push_pull_loss.1} parent=5 // pred_check
      %p660 = pneg %p659
    $region34: #{push_pull_loss.1} parent=5 // pred_check_branch
      %662 = sbr.rel (%p660) target = $region36
    $region35: #{push_pull_loss.1} parent=5 // pred_region
      %s663 = ssub.s32 %s8, 2
      // Predicated region
      $region37: #{push_pull_loss.1} parent=35 // pred_check
        %p664 = pneg %p89
      $region38: #{push_pull_loss.1} parent=35 // pred_check_branch
        %666 = sbr.rel (%p664) target = $region40
      $region39: #{push_pull_loss.1} parent=35 // pred_region
        %p667 = scmp.lt.s32.totalorder %s14, 1
        %s668 = scalar_select %p667, %s14, 1
        %s669 = smul.addr %s668, 8
        %s670 = scalar_lea.vmem %s2, %s669
      $region40: #{push_pull_loss.1} parent=35 // pred_fallthru
        _
    $region36: #{push_pull_loss.1} parent=5 // pred_fallthru
      _
  $region6: #{push_pull_loss.1} parent=0 // loop_footer
    %s12 = sadd.s32 1, %s8
  $region7: #{push_pull_loss.1} parent=0 // loop_footer_branch
    %7 = sbr.rel target = $region3
  $region8: #{push_pull_loss.1} parent=0 // loop_exit
    _

</llo_original>
